<compile_context>
chip_gen: v6e
topology: v6e:2x2x1
jax: 0.10.0
libtpu: 0.0.40
codegen_flags: <defaults>
</compile_context>

<pallas_src>
import functools

import jax
import jax.numpy as jnp
from jax.experimental import pallas as pl
from jax.experimental.pallas import tpu as pltpu


def _round_up(x, m):
    return ((x + m - 1) // m) * m


# ---------------------------------------------------------------------------
# Kernel 1: support = x @ W   (bf16 inputs, f32 accumulate, bf16 result)
# ---------------------------------------------------------------------------
def support_kernel(x_ref, w_ref, s_ref):
    s_ref[...] = jnp.dot(
        x_ref[...], w_ref[...], preferred_element_type=jnp.float32
    ).astype(s_ref.dtype)


# ---------------------------------------------------------------------------
# Kernel 2 (row-tiled): out_tile = dropout(relu(adj_tile @ support + b))
# ---------------------------------------------------------------------------
def agg_kernel(adj_ref, s_ref, b_ref, bits_ref, o_ref, *,
               keep_threshold_i32, inv_keep, mode):
    out = jnp.dot(adj_ref[...], s_ref[...], preferred_element_type=jnp.float32)
    out = out + b_ref[...]            # (1, H) broadcasts over rows
    out = jnp.maximum(out, 0.0)       # ReLU

    if mode == "zero":                # training with p == 1.0
        out = jnp.zeros_like(out)
    elif mode == "dropout":
        # bits are uniform int32; keep with prob (1 - p): bits >= p*2^32 - 2^31.
        keep = bits_ref[...] >= jnp.int32(keep_threshold_i32)
        out = jnp.where(keep, out * inv_keep, 0.0)

    o_ref[...] = out.astype(o_ref.dtype)


# ---------------------------------------------------------------------------
# Wrapper
# ---------------------------------------------------------------------------
def gcn_one_forward(x, adj, weight, bias, *, dropout_p=0.5, training=True,
                    dropout_key=None, tile_m=128):
    n, nfeat = x.shape
    nhid = weight.shape[1]

    # Lane-dense / MXU-friendly padding.
    f_pad = _round_up(nfeat, 128)
    h_pad = _round_up(nhid, 128)
    tile_m = min(int(tile_m), _round_up(n, 8))   # row tile (multiple of 8)
    n_pad = _round_up(n, tile_m)

    cast = jnp.bfloat16
    x_p = jnp.zeros((n_pad, f_pad), cast).at[:n, :nfeat].set(x.astype(cast))
    adj_p = jnp.zeros((n_pad, n_pad), cast).at[:n, :n].set(adj.astype(cast))
    w_p = jnp.zeros((f_pad, h_pad), cast).at[:nfeat, :nhid].set(
        weight.astype(cast))
    b_p = jnp.zeros((1, h_pad), jnp.float32).at[0, :nhid].set(
        bias.astype(jnp.float32))

    # --- support = x @ W (kept in bf16 for the second MXU matmul) -----------
    support = pl.pallas_call(
        support_kernel,
        out_shape=jax.ShapeDtypeStruct((n_pad, h_pad), cast),
        in_specs=[
            pl.BlockSpec(memory_space=pltpu.MemorySpace.VMEM),
            pl.BlockSpec(memory_space=pltpu.MemorySpace.VMEM),
        ],
        out_specs=pl.BlockSpec(memory_space=pltpu.MemorySpace.VMEM),
    )(x_p, w_p)

    # --- dropout configuration ----------------------------------------------
    p = float(dropout_p)
    if training and p >= 1.0:
        mode = "zero"
    elif training and p > 0.0:
        mode = "dropout"
    else:
        mode = "none"
    inv_keep = 1.0 / (1.0 - p) if p < 1.0 else 0.0
    thr = int(round(p * 2.0 ** 32)) - 2 ** 31
    thr = max(-(2 ** 31), min(thr, 2 ** 31 - 1))

    if mode == "dropout":
        if dropout_key is None:
            dropout_key = jax.random.PRNGKey(0)
        bits_u32 = jax.random.bits(dropout_key, (n_pad, h_pad), dtype=jnp.uint32)
        bits = jax.lax.bitcast_convert_type(bits_u32, jnp.int32)
    else:
        bits = jnp.zeros((n_pad, h_pad), jnp.int32)

    # --- row-tiled aggregation: adj @ support + b, ReLU, dropout ------------
    grid = (n_pad // tile_m,)
    kernel = functools.partial(
        agg_kernel, keep_threshold_i32=thr, inv_keep=inv_keep, mode=mode)

    out_p = pl.pallas_call(
        kernel,
        out_shape=jax.ShapeDtypeStruct((n_pad, h_pad), jnp.float32),
        grid=grid,
        in_specs=[
            pl.BlockSpec((tile_m, n_pad), lambda i: (i, 0)),   # adj row tile
            pl.BlockSpec((n_pad, h_pad), lambda i: (0, 0)),    # support (resident)
            pl.BlockSpec((1, h_pad), lambda i: (0, 0)),        # bias (resident)
            pl.BlockSpec((tile_m, h_pad), lambda i: (i, 0)),   # dropout bits tile
        ],
        out_specs=pl.BlockSpec((tile_m, h_pad), lambda i: (i, 0)),
        compiler_params=pltpu.CompilerParams(
            dimension_semantics=("parallel",)),
    )(adj_p, support, b_p, bits)

    return out_p[:n, :nhid].astype(x.dtype)


def init_params(key, nfeat, nhid):
    # GraphConvolution.reset_parameters: uniform(-stdv, stdv), stdv = 1/sqrt(nhid)
    kw, kb = jax.random.split(key)
    stdv = 1.0 / (nhid ** 0.5)
    weight = jax.random.uniform(kw, (nfeat, nhid), jnp.float32, -stdv, stdv)
    bias = jax.random.uniform(kb, (nhid,), jnp.float32, -stdv, stdv)
    return weight, bias


if __name__ == "__main__":
    N, NFEAT, NHID = 32, 16, 32
    DROPOUT = 0.5

    key = jax.random.PRNGKey(0)
    kx, ka, kp, kd = jax.random.split(key, 4)

    x = jax.random.normal(kx, (N, NFEAT), jnp.float32)

    # Symmetric, self-looped, row-normalized dense adjacency.
    a = (jax.random.uniform(ka, (N, N)) < 0.2).astype(jnp.float32)
    a = jnp.maximum(a, a.T) + jnp.eye(N, dtype=jnp.float32)
    adj = a / jnp.sum(a, axis=1, keepdims=True)

    weight, bias = init_params(kp, NFEAT, NHID)

    # Eval mode (dropout is identity): compare against the f32 JAX reference.
    out_eval = gcn_one_forward(x, adj, weight, bias,
                               dropout_p=DROPOUT, training=False)
    jax.block_until_ready(out_eval)
    ref_eval = jnp.maximum(adj @ (x @ weight) + bias, 0.0)
    assert out_eval.shape == (N, NHID)
    # bf16 operands -> loosened tolerance vs the f32 reference.
    assert jnp.allclose(out_eval, ref_eval, atol=5e-2, rtol=5e-2)

    # Training mode: deterministic host-generated dropout mask.
    out_train = gcn_one_forward(x, adj, weight, bias,
                                dropout_p=DROPOUT, training=True,
                                dropout_key=kd)
    jax.block_until_ready(out_train)
    assert out_train.shape == (N, NHID)
    pos = ref_eval > 5e-2                      # clearly-positive entries
    dropped = jnp.sum((out_train == 0.0) & pos)
    frac = dropped / jnp.maximum(jnp.sum(pos), 1)
    assert 0.25 < float(frac) < 0.75           # ~p of positives dropped

    print("KERNEL_OK")
</pallas_src>

<mosaic_0001>
module attributes {stable_mosaic.version = 11 : i64} {
  func.func @support_kernel(%arg0: memref<32x128xbf16, #tpu.memory_space<vmem>>, %arg1: memref<128x128xbf16, #tpu.memory_space<vmem>>, %arg2: memref<32x128xbf16, #tpu.memory_space<vmem>>) attributes {dimension_semantics = [], scalar_prefetch = 0 : i64, scratch_operands = 0 : i64, tpu.core_type = #tpu.core_type<tc>} {
    %c0 = arith.constant 0 : index
    %c0_0 = arith.constant 0 : index
    %0 = vector.load %arg0[%c0, %c0_0] : memref<32x128xbf16, #tpu.memory_space<vmem>>, vector<32x128xbf16>
    %c0_1 = arith.constant 0 : index
    %c0_2 = arith.constant 0 : index
    %1 = vector.load %arg1[%c0_1, %c0_2] : memref<128x128xbf16, #tpu.memory_space<vmem>>, vector<128x128xbf16>
    %cst = arith.constant dense<0.000000e+00> : vector<32x128xf32>
    %2 = tpu.matmul %0, %1, %cst {dimension_numbers = #tpu.dot_dimension_numbers<[1], [0], [0], [1], [0, 0, 1, 1], [], []>} : vector<32x128xbf16>, vector<128x128xbf16>, vector<32x128xf32> -> vector<32x128xf32>
    %3 = arith.truncf %2 : vector<32x128xf32> to vector<32x128xbf16>
    %c0_3 = arith.constant 0 : index
    %c0_4 = arith.constant 0 : index
    %4 = vector.load %arg2[%c0_3, %c0_4] : memref<32x128xbf16, #tpu.memory_space<vmem>>, vector<32x128xbf16>
    tpu.vector_store %arg2[%c0_3, %c0_4], %3 {strides = array<i32>} : memref<32x128xbf16, #tpu.memory_space<vmem>>, vector<32x128xbf16>,
    return
  }
}

</mosaic_0001>

<llo_original>
// kernel: tpu_custom_call.1
$region0: #{tpu_custom_call.1}
  #allocation0 [shape = 'u32[]', space=smem, size = 0x4, offset = 0x4, fixed_abs, tag = 'smem constant byte address 0x4 - core index']
  #allocation1 [shape = 'u32[144,128]{1,0:T(1,128)}', space=vmem, size = 0x12000, scoped, tag = 'internal scratch']
  %s0 = inlined_call_operand.hbm [shape: bf16[32,128], index: 0, kind: input, shape index: {}]
  %s1 = inlined_call_operand.hbm [shape: bf16[128,128], index: 1, kind: input, shape index: {}]
  %s2 = inlined_call_operand.hbm [shape: bf16[32,128], index: 2, kind: output, shape index: {}]
  %s3 = sld [smem:[#allocation0]]
  $region26: #{tpu_custom_call.1} parent=0
    _
  %s5 = ssub.s32 1, %s3
  %s6 = scalar_select 0, %s5, %s3
  $region1: #{tpu_custom_call.1} parent=0
    #allocation2 [shape = 'u8[8192]{0}', space=vmem, size = 0x2000, scoped, tag = 'input window, operand 0, single buffered']
    #allocation3 [shape = 's32[1]{0}', space=sflag, size = 0x4, scoped, tag = 'scoped memory for tpu_custom_call.1']
    #allocation4 [shape = 's32[1]{0}', space=sflag, size = 0x4, scoped, tag = 'scoped memory for tpu_custom_call.1']
    #allocation5 [shape = 'u8[32768]{0}', space=vmem, size = 0x8000, scoped, tag = 'input window, operand 1, single buffered']
    #allocation6 [shape = 's32[1]{0}', space=sflag, size = 0x4, scoped, tag = 'scoped memory for tpu_custom_call.1']
    #allocation7 [shape = 'u8[8192]{0}', space=vmem, size = 0x2000, scoped, tag = 'output window, operand 0, single buffered']
    %7 = vsyncpa [#allocation3], 0
    %8 = vsyncpa [#allocation6], 0
    %9 = vsyncpa [#allocation4], 0
    // Predicated region
    $region2: #{tpu_custom_call.1} parent=1 // pred_check
      _
    $region3: #{tpu_custom_call.1} parent=1 // pred_check_branch
      %11 = sbr.rel (0) target = $region5
    $region4: #{tpu_custom_call.1} parent=1 // pred_region
      %s13 = ssub.s32 256, 256
      %14 = vsyncadd [#allocation3], %s13
      %s15 = sshll.u32 [#allocation2], 4
      %s16 = int_to_ptr.vmem [resolvable:$true] %s15
      %21 = dma.hbm_to_vmem [thread:$0]  %s0, 256, %s16, [#allocation3], 64, 64, 4
    $region5: #{tpu_custom_call.1} parent=1 // pred_fallthru
      _
    // Predicated region
    $region6: #{tpu_custom_call.1} parent=1 // pred_check
      _
    $region7: #{tpu_custom_call.1} parent=1 // pred_check_branch
      %23 = sbr.rel (0) target = $region9
    $region8: #{tpu_custom_call.1} parent=1 // pred_region
      %s25 = ssub.s32 1024, 1024
      %26 = vsyncadd [#allocation6], %s25
      %s27 = sshll.u32 [#allocation5], 4
      %s28 = int_to_ptr.vmem [resolvable:$true] %s27
      %33 = dma.hbm_to_vmem [thread:$0]  %s1, 1024, %s28, [#allocation6], 64, 64, 4
    $region9: #{tpu_custom_call.1} parent=1 // pred_fallthru
      _
    // Predicated region
    $region10: #{tpu_custom_call.1} parent=1 // pred_check
      _
    $region11: #{tpu_custom_call.1} parent=1 // pred_check_branch
      %35 = sbr.rel (0) target = $region13
    $region12: #{tpu_custom_call.1} parent=1 // pred_region
      %36 = dma.done [#allocation3], 256
    $region13: #{tpu_custom_call.1} parent=1 // pred_fallthru
      _
    // Predicated region
    $region14: #{tpu_custom_call.1} parent=1 // pred_check
      _
    $region15: #{tpu_custom_call.1} parent=1 // pred_check_branch
      %38 = sbr.rel (0) target = $region17
    $region16: #{tpu_custom_call.1} parent=1 // pred_region
      %39 = dma.done [#allocation6], 1024
    $region17: #{tpu_custom_call.1} parent=1 // pred_fallthru
      _
    %v41 = vld [vmem:[#allocation2] sm:$0xf]
    %v42 = vld [vmem:[#allocation2 + $0x4] sm:$0xf]
    %v43 = vld [vmem:[#allocation2 + $0x8] sm:$0xf]
    %v44 = vld [vmem:[#allocation2 + $0xc] sm:$0xf]
    %v45 = vld [vmem:[#allocation5] sm:$0xf]
    %v46 = vld [vmem:[#allocation5 + $0x4] sm:$0xf]
    %v47 = vld [vmem:[#allocation5 + $0x8] sm:$0xf]
    %v48 = vld [vmem:[#allocation5 + $0xc] sm:$0xf]
    %v49 = vld [vmem:[#allocation5 + $0x10] sm:$0xf]
    %v50 = vld [vmem:[#allocation5 + $0x14] sm:$0xf]
    %v51 = vld [vmem:[#allocation5 + $0x18] sm:$0xf]
    %v52 = vld [vmem:[#allocation5 + $0x1c] sm:$0xf]
    %v53 = vld [vmem:[#allocation5 + $0x20] sm:$0xf]
    %v54 = vld [vmem:[#allocation5 + $0x24] sm:$0xf]
    %v55 = vld [vmem:[#allocation5 + $0x28] sm:$0xf]
    %v56 = vld [vmem:[#allocation5 + $0x2c] sm:$0xf]
    %v57 = vld [vmem:[#allocation5 + $0x30] sm:$0xf]
    %v58 = vld [vmem:[#allocation5 + $0x34] sm:$0xf]
    %v59 = vld [vmem:[#allocation5 + $0x38] sm:$0xf]
    %v60 = vld [vmem:[#allocation5 + $0x3c] sm:$0xf]
    %v65 = vunpack.c.l.b16 %v41
    %v66 = vunpack.c.l.b16 %v42
    %v67 = vunpack.c.l.b16 %v43
    %v68 = vunpack.c.l.b16 %v44
    %v69 = vpack.c.b16 %v66, %v65
    %v70 = vpack.c.b16 %v68, %v67
    %v89 = vunpack.c.l.b16 %v45
    %v90 = vunpack.c.l.b16 %v46
    %v91 = vunpack.c.l.b16 %v47
    %v92 = vunpack.c.l.b16 %v48
    %v93 = vunpack.c.l.b16 %v49
    %v94 = vunpack.c.l.b16 %v50
    %v95 = vunpack.c.l.b16 %v51
    %v96 = vunpack.c.l.b16 %v52
    %v97 = vunpack.c.l.b16 %v53
    %v98 = vunpack.c.l.b16 %v54
    %v99 = vunpack.c.l.b16 %v55
    %v100 = vunpack.c.l.b16 %v56
    %v101 = vunpack.c.l.b16 %v57
    %v102 = vunpack.c.l.b16 %v58
    %v103 = vunpack.c.l.b16 %v59
    %v104 = vunpack.c.l.b16 %v60
    %v105 = vpack.c.b16 %v90, %v89
    %v106 = vpack.c.b16 %v92, %v91
    %v107 = vpack.c.b16 %v94, %v93
    %v108 = vpack.c.b16 %v96, %v95
    %v109 = vpack.c.b16 %v98, %v97
    %v110 = vpack.c.b16 %v100, %v99
    %v111 = vpack.c.b16 %v102, %v101
    %v112 = vpack.c.b16 %v104, %v103
    %121 = vmatprep.subr.bf16.mxu0 0
    %122 = vmatpush1.bf16.msra.mxu0 %v112
    %123 = vmatprep.subr.bf16.mxu0 0
    %124 = vmatpush1.bf16.msra.mxu0 %v111
    %125 = vmatprep.subr.bf16.mxu0 0
    %126 = vmatpush1.bf16.msra.mxu0 %v110
    %127 = vmatprep.subr.bf16.mxu0 0
    %128 = vmatpush1.bf16.msra.mxu0 %v109
    %129 = vmatprep.subr.bf16.mxu0 0
    %130 = vmatpush1.bf16.msra.mxu0 %v108
    %131 = vmatprep.subr.bf16.mxu0 0
    %132 = vmatpush1.bf16.msra.mxu0 %v107
    %133 = vmatprep.subr.bf16.mxu0 0
    %134 = vmatpush1.bf16.msra.mxu0 %v106
    %135 = vmatprep.subr.bf16.mxu0 0
    %136 = vmatpush1.bf16.msra.mxu0 %v105
    %137 = vmatprep.subr.bf16.mxu0 0
    %138 = vmatpush2.bf16.msra.mxu0 0
    %139 = vmatprep.subr.bf16.mxu0 0
    %140 = vmatpush2.bf16.msra.mxu0 0
    %141 = vmatprep.subr.bf16.mxu0 0
    %142 = vmatpush2.bf16.msra.mxu0 0
    %143 = vmatprep.subr.bf16.mxu0 0
    %144 = vmatpush2.bf16.msra.mxu0 0
    %145 = vmatprep.subr.bf16.mxu0 0
    %146 = vmatpush2.bf16.msra.mxu0 0
    %147 = vmatprep.subr.bf16.mxu0 0
    %148 = vmatpush2.bf16.msra.mxu0 0
    %149 = vmatprep.subr.bf16.mxu0 0
    %150 = vmatpush2.bf16.msra.mxu0 0
    %151 = vmatprep.subr.bf16.mxu0 0
    %152 = vmatpush2.bf16.msra.mxu0 0
    %153 = vmatprep.mubr.bf16.mxu0 0
    %154 = vmatmul.mubr.bf16.gmra.mxu0 %v69
    %v155 = vpop.f32.mrf.mxu0
    %v156 = vadd.f32 0.0, %v155
    %v157 = vpop.f32.mrf.mxu0
    %v158 = vpop.f32.mrf.mxu0
    %v159 = vadd.f32 0.0, %v158
    %v160 = vpop.f32.mrf.mxu0
    %161 = vmatprep.mubr.bf16.mxu0 0
    %162 = vmatmul.mubr.bf16.gmra.mxu0 %v70
    %v163 = vpop.f32.mrf.mxu0
    %v164 = vadd.f32 0.0, %v163
    %v165 = vpop.f32.mrf.mxu0
    %v166 = vpop.f32.mrf.mxu0
    %v167 = vadd.f32 0.0, %v166
    %v168 = vpop.f32.mrf.mxu0
    %169 = vdwg.mxu0
    %v170 = vpack.c.bf16 %v159, %v156
    %v171 = vpack.c.bf16 %v167, %v164
    %v174 = vunpack.c.l.b16 %v170
    %v175 = vunpack.c.h.b16 %v170
    %v176 = vunpack.c.l.b16 %v171
    %v177 = vunpack.c.h.b16 %v171
    %v178 = vpack.c.b16 %v174, %v174
    %v179 = vpack.c.b16 %v175, %v175
    %v180 = vpack.c.b16 %v176, %v176
    %v181 = vpack.c.b16 %v177, %v177
    %186 = vst [vmem:[#allocation7] sm:$0xf] %v178
    %187 = vst [vmem:[#allocation7 + $0x4] sm:$0xf] %v179
    %188 = vst [vmem:[#allocation7 + $0x8] sm:$0xf] %v180
    %189 = vst [vmem:[#allocation7 + $0xc] sm:$0xf] %v181
    // Predicated region
    $region18: #{tpu_custom_call.1} parent=1 // pred_check
      _
    $region19: #{tpu_custom_call.1} parent=1 // pred_check_branch
      %191 = sbr.rel (0) target = $region21
    $region20: #{tpu_custom_call.1} parent=1 // pred_region
      %s193 = ssub.s32 256, 256
      %194 = vsyncadd [#allocation4], %s193
      %s195 = sshll.u32 [#allocation7], 4
      %s196 = int_to_ptr.vmem [resolvable:$true] %s195
      %201 = dma.vmem_to_hbm [thread:$0]  %s196, 256, %s2, [#allocation4], 64, 64, 4
    $region21: #{tpu_custom_call.1} parent=1 // pred_fallthru
      _
    // Predicated region
    $region22: #{tpu_custom_call.1} parent=1 // pred_check
      _
    $region23: #{tpu_custom_call.1} parent=1 // pred_check_branch
      %203 = sbr.rel (0) target = $region25
    $region24: #{tpu_custom_call.1} parent=1 // pred_region
      %204 = dma.done [#allocation4], 256
    $region25: #{tpu_custom_call.1} parent=1 // pred_fallthru
      _
    %205 = vsyncpa [#allocation3], 1
    %206 = vsyncpa [#allocation6], 1
    %207 = vsyncpa [#allocation4], 1

</llo_original>
